<compile_context>
chip_gen: v5e
topology: v5e:2x2
jax: 0.10.0
libtpu: 0.0.40
codegen_flags: <defaults>
</compile_context>

<pallas_src>
import jax
import jax.numpy as jnp
from jax.experimental import pallas as pl
from jax.experimental.pallas import tpu as pltpu


def _weighted_sum_kernel(x_ref, wb_ref, o_ref):
    # x_ref : (F, N_tile) f32 in VMEM   (lane-dense: rows on the 128-lane axis)
    # wb_ref: (F+1,)      f32 in SMEM   (w[0..F-1], b at index F — scalar reads)
    # o_ref : (1, N_tile) f32 in VMEM   (lane-dense, unmasked store)
    f = x_ref.shape[0]
    # Bias folded into the first multiply-add; remaining features are
    # statically unrolled scalar * row FMAs on the VPU (no XLU reduce, no MXU).
    acc = x_ref[0:1, :] * wb_ref[0] + wb_ref[f]
    for j in range(1, f):
        acc = acc + x_ref[j:j + 1, :] * wb_ref[j]
    o_ref[...] = acc


def model_forward(x, w, b, *, tile_n=2048):
    """y = sum(w * x, axis=1, keepdims=True) + b   (all float32).

    x: (N, F), w: (1, F), b: (1,)  ->  y: (N, 1)
    """
    n, f = x.shape

    # Single fused scalar operand in SMEM: [w_0, ..., w_{F-1}, b].
    wb = jnp.concatenate([jnp.reshape(w, (f,)), jnp.reshape(b, (1,))])

    # Lane-dense layout: (F, N).  TODO(synk): in a real pipeline, plumb this
    # layout from the producer instead of transposing here.
    xt = x.T

    cost = pl.CostEstimate(
        flops=2 * n * f,
        transcendentals=0,
        bytes_accessed=(n * f + (f + 1) + n) * x.dtype.itemsize,
    )

    if n <= tile_n:
        # Gridless single-block path: no pipeline prologue/epilogue, one DMA in,
        # one lane-dense store out.  Ideal for the N=20 test-sized problem.
        out = pl.pallas_call(
            _weighted_sum_kernel,
            out_shape=jax.ShapeDtypeStruct((1, n), x.dtype),
            in_specs=[
                pl.BlockSpec(memory_space=pltpu.MemorySpace.VMEM),  # x (F, N)
                pl.BlockSpec(memory_space=pltpu.MemorySpace.SMEM),  # [w, b]
            ],
            out_specs=pl.BlockSpec(memory_space=pltpu.MemorySpace.VMEM),
            cost_estimate=cost,
        )(xt, wb)
        return out.reshape(n, 1)

    # Scaled-up path: tile the lane axis with large lane-dense blocks.
    # HBM-bandwidth bound on every generation, so block size is the only lever;
    # "parallel" shards the grid across v7x's two TensorCores (no-op on v5e/v6e).
    n_pad = pl.cdiv(n, tile_n) * tile_n
    if n_pad != n:
        xt = jnp.pad(xt, ((0, 0), (0, n_pad - n)))

    out = pl.pallas_call(
        _weighted_sum_kernel,
        out_shape=jax.ShapeDtypeStruct((1, n_pad), x.dtype),
        grid_spec=pltpu.PrefetchScalarGridSpec(
            num_scalar_prefetch=0,
            grid=(n_pad // tile_n,),
            in_specs=[
                pl.BlockSpec((f, tile_n), lambda i: (0, i)),
                pl.BlockSpec((f + 1,), lambda i: (0,),
                             memory_space=pltpu.MemorySpace.SMEM),
            ],
            out_specs=pl.BlockSpec((1, tile_n), lambda i: (0, i)),
        ),
        compiler_params=pltpu.CompilerParams(
            dimension_semantics=("parallel",)),
        cost_estimate=cost,
    )(xt, wb)
    return out[:, :n].reshape(n, 1)


if __name__ == "__main__":
    key = jax.random.PRNGKey(0)
    kx, kw, kb = jax.random.split(key, 3)

    # Input matching the test script: X = torch.randn(20, 3)
    x = jax.random.normal(kx, (20, 3), dtype=jnp.float32)

    # Parameter shapes from Model.__init__: w ~ randn(1, 3), b ~ randn(1)
    w = jax.random.normal(kw, (1, 3), dtype=jnp.float32)
    b = jax.random.normal(kb, (1,), dtype=jnp.float32)

    y = jax.block_until_ready(model_forward(x, w, b))
    y_ref = jnp.sum(w * x, axis=1, keepdims=True) + b
    assert y.shape == (20, 1)
    assert jnp.allclose(y, y_ref, atol=1e-5, rtol=1e-5)

    # Also exercise the tiled "parallel" grid path used when N scales
    # (non-multiple N to cover the padding logic).
    x_big = jax.random.normal(kx, (5000, 3), dtype=jnp.float32)
    y_big = jax.block_until_ready(model_forward(x_big, w, b, tile_n=2048))
    y_big_ref = jnp.sum(w * x_big, axis=1, keepdims=True) + b
    assert y_big.shape == (5000, 1)
    assert jnp.allclose(y_big, y_big_ref, atol=1e-5, rtol=1e-5)

    print("KERNEL_OK")
</pallas_src>

<mosaic_0001>
module attributes {stable_mosaic.version = 11 : i64} {
  func.func @_weighted_sum_kernel(%arg0: memref<3x20xf32, #tpu.memory_space<vmem>>, %arg1: memref<4xf32, #tpu.memory_space<smem>>, %arg2: memref<1x20xf32, #tpu.memory_space<vmem>>) attributes {dimension_semantics = [], scalar_prefetch = 0 : i64, scratch_operands = 0 : i64, tpu.core_type = #tpu.core_type<tc>} {
    %c0 = arith.constant 0 : index
    %c0_0 = arith.constant 0 : index
    %0 = vector.load %arg0[%c0, %c0_0] : memref<3x20xf32, #tpu.memory_space<vmem>>, vector<1x20xf32>
    %c0_1 = arith.constant 0 : index
    %1 = memref.load %arg1[%c0_1] : memref<4xf32, #tpu.memory_space<smem>>
    %2 = vector.broadcast %1 : f32 to vector<1x20xf32>
    %3 = arith.mulf %0, %2 : vector<1x20xf32>
    %c3 = arith.constant 3 : index
    %4 = memref.load %arg1[%c3] : memref<4xf32, #tpu.memory_space<smem>>
    %5 = vector.broadcast %4 : f32 to vector<1x20xf32>
    %6 = arith.addf %3, %5 : vector<1x20xf32>
    %c1 = arith.constant 1 : index
    %c0_2 = arith.constant 0 : index
    %7 = vector.load %arg0[%c1, %c0_2] : memref<3x20xf32, #tpu.memory_space<vmem>>, vector<1x20xf32>
    %c1_3 = arith.constant 1 : index
    %8 = memref.load %arg1[%c1_3] : memref<4xf32, #tpu.memory_space<smem>>
    %9 = vector.broadcast %8 : f32 to vector<1x20xf32>
    %10 = arith.mulf %7, %9 : vector<1x20xf32>
    %11 = arith.addf %6, %10 : vector<1x20xf32>
    %c2 = arith.constant 2 : index
    %c0_4 = arith.constant 0 : index
    %12 = vector.load %arg0[%c2, %c0_4] : memref<3x20xf32, #tpu.memory_space<vmem>>, vector<1x20xf32>
    %c2_5 = arith.constant 2 : index
    %13 = memref.load %arg1[%c2_5] : memref<4xf32, #tpu.memory_space<smem>>
    %14 = vector.broadcast %13 : f32 to vector<1x20xf32>
    %15 = arith.mulf %12, %14 : vector<1x20xf32>
    %16 = arith.addf %11, %15 : vector<1x20xf32>
    %c0_6 = arith.constant 0 : index
    %c0_7 = arith.constant 0 : index
    %17 = vector.load %arg2[%c0_6, %c0_7] : memref<1x20xf32, #tpu.memory_space<vmem>>, vector<1x20xf32>
    tpu.vector_store %arg2[%c0_6, %c0_7], %16 {strides = array<i32>} : memref<1x20xf32, #tpu.memory_space<vmem>>, vector<1x20xf32>,
    return
  }
}

</mosaic_0001>

<llo_original>
// kernel: tpu_custom_call.1
$region0: #{tpu_custom_call.1}
  #allocation0 [shape = 'u32[]', space=smem, size = 0x4, offset = 0x4, fixed_abs, tag = 'smem constant byte address 0x4 - core index']
  #allocation1 [shape = 'u32[72,128]{1,0:T(1,128)}', space=vmem, size = 0x9000, scoped, tag = 'internal scratch']
  %s0 = inlined_call_operand.hbm [shape: f32[3,20], index: 0, kind: input, shape index: {}]
  %s1 = inlined_call_operand.hbm [shape: f32[4], index: 1, kind: input, shape index: {}]
  %s2 = inlined_call_operand.hbm [shape: f32[1,20], index: 2, kind: output, shape index: {}]
  %s3 = sld [smem:[#allocation0]]
  $region26: #{tpu_custom_call.1} parent=0
    _
  %s5 = ssub.s32 1, %s3
  %s6 = scalar_select 0, %s5, %s3
  $region1: #{tpu_custom_call.1} parent=0
    #allocation2 [shape = 'u8[2048]{0}', space=vmem, size = 0x800, scoped, tag = 'input window, operand 0, single buffered']
    #allocation3 [shape = 's32[1]{0}', space=sflag, size = 0x4, scoped, tag = 'scoped memory for tpu_custom_call.1']
    #allocation4 [shape = 's32[1]{0}', space=sflag, size = 0x4, scoped, tag = 'scoped memory for tpu_custom_call.1']
    #allocation5 [shape = 's32[1]{0}', space=sflag, size = 0x4, scoped, tag = 'scoped memory for tpu_custom_call.1']
    #allocation6 [shape = 'u8[512]{0}', space=smem, size = 0x200, scoped, tag = 'input window, operand 1, single buffered']
    #allocation7 [shape = 'u8[512]{0}', space=vmem, size = 0x400, scoped, tag = 'output window, operand 0, single buffered']
    %7 = vsyncpa [#allocation3], 0
    %8 = vsyncpa [#allocation5], 0
    %9 = vsyncpa [#allocation4], 0
    // Predicated region
    $region2: #{tpu_custom_call.1} parent=1 // pred_check
      _
    $region3: #{tpu_custom_call.1} parent=1 // pred_check_branch
      %11 = sbr.rel (0) target = $region5
    $region4: #{tpu_custom_call.1} parent=1 // pred_region
      %13 = vsyncadd [#allocation3], 0
      %s15 = sshll.u32 %s0, 4
      %s16 = int_to_ptr.hbm [resolvable:$true] %s15
      %s17 = sshll.u32 [#allocation2], 4
      %s18 = int_to_ptr.vmem [resolvable:$true] %s17
      %20 = dma.hbm_to_vmem [thread:$0]  %s16, 64, %s18, [#allocation3]
    $region5: #{tpu_custom_call.1} parent=1 // pred_fallthru
      _
    // Predicated region
    $region6: #{tpu_custom_call.1} parent=1 // pred_check
      _
    $region7: #{tpu_custom_call.1} parent=1 // pred_check_branch
      %22 = sbr.rel (0) target = $region9
    $region8: #{tpu_custom_call.1} parent=1 // pred_region
      %24 = vsyncadd [#allocation5], 0
      %s26 = sshll.u32 %s1, 4
      %s27 = int_to_ptr.hbm [resolvable:$true] %s26
      %29 = dma.hbm_to_smem %s27, 16, [#allocation6], [#allocation5]
    $region9: #{tpu_custom_call.1} parent=1 // pred_fallthru
      _
    // Predicated region
    $region10: #{tpu_custom_call.1} parent=1 // pred_check
      _
    $region11: #{tpu_custom_call.1} parent=1 // pred_check_branch
      %31 = sbr.rel (0) target = $region13
    $region12: #{tpu_custom_call.1} parent=1 // pred_region
      %33 = dma.done [#allocation3], 64
    $region13: #{tpu_custom_call.1} parent=1 // pred_fallthru
      _
    // Predicated region
    $region14: #{tpu_custom_call.1} parent=1 // pred_check
      _
    $region15: #{tpu_custom_call.1} parent=1 // pred_check_branch
      %35 = sbr.rel (0) target = $region17
    $region16: #{tpu_custom_call.1} parent=1 // pred_region
      %37 = dma.done [#allocation5], 16
    $region17: #{tpu_custom_call.1} parent=1 // pred_fallthru
      _
    %38 = sfence
    %v39 = vld [vmem:[#allocation2] sm:$0x1]
    %s40 = sld [smem:[#allocation6]]
    %v41 = vstv %s40
    %v42 = vmul.f32 %v39, %v41
    %s43 = sld [smem:[#allocation6 + $0x3]]
    %v44 = vstv %s43
    %v45 = vadd.f32 %v42, %v44
    %v46 = vld [vmem:[#allocation2 + $0x1] sm:$0x1]
    %s47 = sld [smem:[#allocation6 + $0x1]]
    %v48 = vstv %s47
    %v49 = vmul.f32 %v46, %v48
    %v50 = vadd.f32 %v45, %v49
    %v51 = vld [vmem:[#allocation2 + $0x2] sm:$0x1]
    %s52 = sld [smem:[#allocation6 + $0x2]]
    %v53 = vstv %s52
    %v54 = vmul.f32 %v51, %v53
    %v55 = vadd.f32 %v50, %v54
    %vm56 = vcmask 155648
    %57 = vst.msk [vmem:[#allocation7] sm:$0x1] %vm56, %v55
    // Predicated region
    $region18: #{tpu_custom_call.1} parent=1 // pred_check
      _
    $region19: #{tpu_custom_call.1} parent=1 // pred_check_branch
      %59 = sbr.rel (0) target = $region21
    $region20: #{tpu_custom_call.1} parent=1 // pred_region
      %61 = vsyncadd [#allocation4], 0
      %s63 = sshll.u32 [#allocation7], 4
      %s64 = int_to_ptr.vmem [resolvable:$true] %s63
      %s65 = sshll.u32 %s2, 4
      %s66 = int_to_ptr.hbm [resolvable:$true] %s65
      %68 = dma.vmem_to_hbm [thread:$0]  %s64, 16, %s66, [#allocation4]
    $region21: #{tpu_custom_call.1} parent=1 // pred_fallthru
      _
    // Predicated region
    $region22: #{tpu_custom_call.1} parent=1 // pred_check
      _
    $region23: #{tpu_custom_call.1} parent=1 // pred_check_branch
      %70 = sbr.rel (0) target = $region25
    $region24: #{tpu_custom_call.1} parent=1 // pred_region
      %72 = dma.done [#allocation4], 16
    $region25: #{tpu_custom_call.1} parent=1 // pred_fallthru
      _
    %73 = vsyncpa [#allocation3], 1
    %74 = vsyncpa [#allocation4], 1
    %75 = vsyncpa [#allocation5], 1

</llo_original>
